<compile_context>
chip_gen: v7x
topology: tpu7x:2x2x1
jax: 0.10.0
libtpu: 0.0.40
codegen_flags: <defaults>
</compile_context>

<pallas_src>
import functools
import math

import jax
import jax.numpy as jnp
from jax.experimental import pallas as pl
from jax.experimental.pallas import tpu as pltpu

LN_EPS = 1e-5


def _pick_tile(dim, pref):
    """Largest tile from {pref,512,384,256,128} that divides dim, else dim."""
    for t in (pref, 512, 384, 256, 128):
        if 0 < t <= dim and dim % t == 0:
            return t
    return dim


def _gelu_tanh(x):
    # TODO(synk): HF Camembert uses exact erf-GELU; tanh approximation used here.
    c = math.sqrt(2.0 / math.pi)
    return 0.5 * x * (1.0 + jnp.tanh(c * (x + 0.044715 * x * x * x)))


# ----------------------------- Pallas kernels ------------------------------

def _linear_kernel(x_ref, w_ref, b_ref, o_ref, *, activation):
    """Matmul (resident weight) + bias (+ optional GELU).  Grid = (M/tm,)."""
    h = jnp.dot(x_ref[...], w_ref[...],
                preferred_element_type=jnp.float32) + b_ref[...]
    if activation == "gelu":
        h = _gelu_tanh(h)
    o_ref[...] = h.astype(o_ref.dtype)


def _linear_add_ln_kernel(x_ref, w_ref, b_ref, r_ref, g_ref, bb_ref, o_ref):
    """Matmul (resident weight) + bias + residual add + LayerNorm."""
    h = (jnp.dot(x_ref[...], w_ref[...], preferred_element_type=jnp.float32)
         + b_ref[...] + r_ref[...].astype(jnp.float32))
    mu = jnp.mean(h, axis=-1, keepdims=True)
    var = jnp.mean(jnp.square(h - mu), axis=-1, keepdims=True)
    y = (h - mu) * jax.lax.rsqrt(var + LN_EPS) * g_ref[...] + bb_ref[...]
    o_ref[...] = y.astype(o_ref.dtype)


def _ln_kernel(x_ref, g_ref, b_ref, o_ref):
    x = x_ref[...].astype(jnp.float32)
    mu = jnp.mean(x, axis=-1, keepdims=True)
    var = jnp.mean(jnp.square(x - mu), axis=-1, keepdims=True)
    o_ref[...] = ((x - mu) * jax.lax.rsqrt(var + LN_EPS) * g_ref[...]
                  + b_ref[...]).astype(o_ref.dtype)


def _mha_kernel(q_ref, k_ref, v_ref, m_ref, probs_ref, ctx_ref, *, hg, hd):
    """One (batch, head-group, query-tile) step of multi-head attention.

    q_ref: (1, tq, W) bf16     k_ref/v_ref: (1, S, W) bf16   (W = hg*hd lanes)
    m_ref: (1, 1, S) f32 additive mask
    probs_ref: (1, hg, tq, S)  ctx_ref: (1, tq, W)
    The 1/sqrt(hd) scale is already folded into the Q projection.
    """
    tq = q_ref.shape[1]
    S = k_ref.shape[1]
    # Hoist the mask broadcast once per grid step (JAX does not CSE it).
    mask = jnp.broadcast_to(m_ref[0], (tq, S))

    ctx_parts = []
    for h in range(hg):
        lo = h * hd
        qh = q_ref[0, :, lo:lo + hd]                       # (tq, hd) bf16
        kh = k_ref[0, :, lo:lo + hd]                       # (S, hd)  bf16
        vh = v_ref[0, :, lo:lo + hd]                       # (S, hd)  bf16
        scores = jax.lax.dot_general(
            qh, kh, (((1,), (1,)), ((), ())),
            preferred_element_type=jnp.float32) + mask     # (tq, S) f32
        mx = jnp.max(scores, axis=-1, keepdims=True)
        e = jnp.exp(scores - mx)
        p = e * pl.reciprocal(jnp.sum(e, axis=-1, keepdims=True), approx=True)
        p_lo = p.astype(probs_ref.dtype)                   # cast early (bf16)
        probs_ref[0, h] = p_lo                             # full-lane (tq, S)
        ctx_parts.append(jnp.dot(p_lo.astype(vh.dtype), vh,
                                 preferred_element_type=jnp.float32))
    ctx = ctx_parts[0] if hg == 1 else jnp.concatenate(ctx_parts, axis=-1)
    ctx_ref[0] = ctx.astype(ctx_ref.dtype)                 # one full-lane store


# ------------------------------ kernel wrappers -----------------------------

def linear(x, w, b, *, activation=None, out_dtype=jnp.bfloat16, tm=256):
    M, K = x.shape
    N = w.shape[1]
    tm = _pick_tile(M, tm)
    return pl.pallas_call(
        functools.partial(_linear_kernel, activation=activation),
        out_shape=jax.ShapeDtypeStruct((M, N), out_dtype),
        grid=(M // tm,),
        in_specs=[
            pl.BlockSpec((tm, K), lambda i: (i, 0)),
            pl.BlockSpec((K, N), lambda i: (0, 0)),   # weight resident in VMEM
            pl.BlockSpec((1, N), lambda i: (0, 0)),
        ],
        out_specs=pl.BlockSpec((tm, N), lambda i: (i, 0)),
        compiler_params=pltpu.CompilerParams(dimension_semantics=("parallel",)),
    )(x, w, b)


def linear_add_layernorm(x, w, b, residual, gamma, beta, *,
                         out_dtype=jnp.bfloat16, tm=256):
    M, K = x.shape
    N = w.shape[1]
    tm = _pick_tile(M, tm)
    return pl.pallas_call(
        _linear_add_ln_kernel,
        out_shape=jax.ShapeDtypeStruct((M, N), out_dtype),
        grid=(M // tm,),
        in_specs=[
            pl.BlockSpec((tm, K), lambda i: (i, 0)),
            pl.BlockSpec((K, N), lambda i: (0, 0)),   # weight resident in VMEM
            pl.BlockSpec((1, N), lambda i: (0, 0)),
            pl.BlockSpec((tm, N), lambda i: (i, 0)),
            pl.BlockSpec((1, N), lambda i: (0, 0)),
            pl.BlockSpec((1, N), lambda i: (0, 0)),
        ],
        out_specs=pl.BlockSpec((tm, N), lambda i: (i, 0)),
        compiler_params=pltpu.CompilerParams(dimension_semantics=("parallel",)),
    )(x, w, b, residual, gamma, beta)


def layernorm(x, gamma, beta, *, out_dtype=jnp.bfloat16, tm=256):
    M, H = x.shape
    tm = _pick_tile(M, tm)
    return pl.pallas_call(
        _ln_kernel,
        out_shape=jax.ShapeDtypeStruct((M, H), out_dtype),
        grid=(M // tm,),
        in_specs=[
            pl.BlockSpec((tm, H), lambda i: (i, 0)),
            pl.BlockSpec((1, H), lambda i: (0, 0)),
            pl.BlockSpec((1, H), lambda i: (0, 0)),
        ],
        out_specs=pl.BlockSpec((tm, H), lambda i: (i, 0)),
        compiler_params=pltpu.CompilerParams(dimension_semantics=("parallel",)),
    )(x, gamma, beta)


def mha_attention(qkv, mask_add, *, heads, probs_dtype=jnp.bfloat16,
                  tq_pref=256):
    """Multi-head attention over the fused QKV projection output.

    qkv: (B, S, 3H) bf16, mask_add: (B, 1, S) f32 additive mask.
    Returns (probs (B, heads, S, S), ctx (B, S, H)).
    The full probabilities are materialized because the PyTorch module
    returns them (output_attentions=True); they are stored in bf16.
    """
    B, S, H3 = qkv.shape
    H = H3 // 3
    hd = H // heads

    # Heads per group: make the per-group lane width a multiple of 128 when
    # possible (hd=64 -> 2 heads / 128 lanes for Camembert-base).
    if hd % 128 == 0:
        hg = 1
    elif 128 % hd == 0 and heads % (128 // hd) == 0:
        hg = 128 // hd
    else:
        hg = heads                      # tiny / unaligned head dims (tests)
    G = heads // hg
    W = hg * hd

    tq = _pick_tile(S, tq_pref)
    QT = S // tq

    lane_split = (W % 128 == 0)
    if lane_split:
        # Slice Q/K/V out of the fused QKV output purely via BlockSpec
        # index_maps (free DMA addressing, no HBM copies).
        q_in = k_in = v_in = qkv
        nW = H // W
        q_map = lambda b, g, t: (b, t, g)
        k_map = lambda b, g, t: (b, 0, nW + g)
        v_map = lambda b, g, t: (b, 0, 2 * nW + g)
    else:
        # Fallback for lane-unaligned head dims (toy shapes): JAX-side slices.
        q_in = qkv[:, :, :H]
        k_in = qkv[:, :, H:2 * H]
        v_in = qkv[:, :, 2 * H:]
        q_map = lambda b, g, t: (b, t, g)
        k_map = lambda b, g, t: (b, 0, g)
        v_map = lambda b, g, t: (b, 0, g)

    probs, ctx = pl.pallas_call(
        functools.partial(_mha_kernel, hg=hg, hd=hd),
        out_shape=(
            jax.ShapeDtypeStruct((B, heads, S, S), probs_dtype),
            jax.ShapeDtypeStruct((B, S, H), jnp.bfloat16),
        ),
        grid=(B, G, QT),
        in_specs=[
            pl.BlockSpec((1, tq, W), q_map),
            pl.BlockSpec((1, S, W), k_map),
            pl.BlockSpec((1, S, W), v_map),
            pl.BlockSpec((1, 1, S), lambda b, g, t: (b, 0, 0)),
        ],
        out_specs=(
            pl.BlockSpec((1, hg, tq, S), lambda b, g, t: (b, g, t, 0)),
            pl.BlockSpec((1, tq, W), lambda b, g, t: (b, t, g)),
        ),
        compiler_params=pltpu.CompilerParams(
            dimension_semantics=("parallel", "parallel", "parallel")),
    )(q_in, k_in, v_in, mask_add)
    return probs, ctx


# ------------------------------ model forward -------------------------------

def camembert_forward(params, input_ids, attn_masks, *, heads,
                      probs_dtype=jnp.bfloat16):
    B, S = input_ids.shape
    H = params["word_emb"].shape[1]
    pad_idx = 1

    # --- embeddings (gathers / position ids stay in JAX; LN is Pallas) ---
    # TODO(synk): embedding gathers left to XLA (no clean Pallas win here).
    not_pad = (input_ids != pad_idx).astype(jnp.int32)
    position_ids = jnp.cumsum(not_pad, axis=1) * not_pad + pad_idx
    word_emb = jnp.take(params["word_emb"], input_ids, axis=0)
    pos_emb = jnp.take(params["pos_emb"], position_ids, axis=0)
    type_emb = params["type_emb"][0][None, None, :]
    emb = (word_emb + pos_emb + type_emb).reshape(B * S, H)
    x = layernorm(emb, params["emb_ln_g"], params["emb_ln_b"])          # bf16

    # additive mask, (B, 1, S); broadcast over heads/queries in the kernel
    mask_add = ((1.0 - attn_masks.astype(jnp.float32)) * -1e9)[:, None, :]

    attentions = []
    for layer in params["layers"]:
        # fused QKV projection (attention scale pre-folded into Q weights/bias)
        qkv = linear(x, layer["qkv_w"], layer["qkv_b"])                 # (B*S, 3H)
        probs, ctx = mha_attention(qkv.reshape(B, S, 3 * H), mask_add,
                                   heads=heads, probs_dtype=probs_dtype)
        attentions.append(probs)

        # output projection + residual + LayerNorm fused in one kernel
        x = linear_add_layernorm(ctx.reshape(B * S, H), layer["o_w"],
                                 layer["o_b"], x,
                                 layer["attn_ln_g"], layer["attn_ln_b"])

        # FFN: (matmul + bias + GELU) then (matmul + bias + residual + LN)
        inter = linear(x, layer["i_w"], layer["i_b"], activation="gelu")
        x = linear_add_layernorm(inter, layer["f_w"], layer["f_b"], x,
                                 layer["ffn_ln_g"], layer["ffn_ln_b"])

    # classifier head on the <s> token: tiny matmul, leave to XLA
    cls_rep = x.reshape(B, S, H)[:, 0].astype(jnp.float32)              # (B, H)
    logits = cls_rep @ params["cls_w"] + params["cls_b"]                # (B, 5)
    return logits, tuple(attentions)


# ------------------------------ parameter init ------------------------------

def init_params(key, vocab, max_pos, hidden, inter, n_layers, n_labels, heads):
    ks = jax.random.split(key, 5 + n_layers)

    def w(k, shape):
        return jax.random.normal(k, shape, dtype=jnp.float32) * 0.02

    scale = 1.0 / math.sqrt(hidden // heads)

    params = {
        "word_emb": w(ks[0], (vocab, hidden)),
        "pos_emb": w(ks[1], (max_pos, hidden)),
        "type_emb": w(ks[2], (2, hidden)),
        "emb_ln_g": jnp.ones((1, hidden), jnp.float32),
        "emb_ln_b": jnp.zeros((1, hidden), jnp.float32),
        "cls_w": w(ks[3], (hidden, n_labels)),
        "cls_b": jnp.zeros((n_labels,), jnp.float32),
        "layers": [],
    }
    for li in range(n_layers):
        lk = jax.random.split(ks[5 + li], 6)
        q_w = w(lk[0], (hidden, hidden))
        k_w = w(lk[1], (hidden, hidden))
        v_w = w(lk[2], (hidden, hidden))
        q_b = jnp.zeros((1, hidden), jnp.float32)
        k_b = jnp.zeros((1, hidden), jnp.float32)
        v_b = jnp.zeros((1, hidden), jnp.float32)
        # fold the 1/sqrt(hd) attention scale into BOTH the Q weight and bias
        qkv_w = jnp.concatenate([q_w * scale, k_w, v_w], axis=1)
        qkv_b = jnp.concatenate([q_b * scale, k_b, v_b], axis=1)
        params["layers"].append({
            "qkv_w": qkv_w.astype(jnp.bfloat16),
            "qkv_b": qkv_b,
            "o_w": w(lk[3], (hidden, hidden)).astype(jnp.bfloat16),
            "o_b": jnp.zeros((1, hidden), jnp.float32),
            "attn_ln_g": jnp.ones((1, hidden), jnp.float32),
            "attn_ln_b": jnp.zeros((1, hidden), jnp.float32),
            "i_w": w(lk[4], (hidden, inter)).astype(jnp.bfloat16),
            "i_b": jnp.zeros((1, inter), jnp.float32),
            "f_w": w(lk[5], (inter, hidden)).astype(jnp.bfloat16),
            "f_b": jnp.zeros((1, hidden), jnp.float32),
            "ffn_ln_g": jnp.ones((1, hidden), jnp.float32),
            "ffn_ln_b": jnp.zeros((1, hidden), jnp.float32),
        })
    return params


# ---------------------------------- main -------------------------------------

if __name__ == "__main__":
    B, S = 2, 8
    VOCAB, MAX_POS = 100, 64
    HIDDEN, HEADS, INTER, LAYERS, LABELS = 32, 4, 64, 2, 5

    key = jax.random.PRNGKey(0)
    pkey, dkey = jax.random.split(key)

    params = init_params(pkey, VOCAB, MAX_POS, HIDDEN, INTER, LAYERS, LABELS,
                         heads=HEADS)

    input_ids = jax.random.randint(dkey, (B, S), 2, VOCAB, dtype=jnp.int32)
    attn_masks = jnp.ones((B, S), jnp.int32)
    # pad the tail of the second sequence to exercise the attention mask
    input_ids = input_ids.at[1, 6:].set(1)     # padding_idx = 1
    attn_masks = attn_masks.at[1, 6:].set(0)

    logits, attentions = camembert_forward(params, input_ids, attn_masks,
                                           heads=HEADS)
    jax.block_until_ready(logits)
    jax.block_until_ready(attentions)

    assert logits.shape == (B, LABELS)
    assert len(attentions) == LAYERS and attentions[0].shape == (B, HEADS, S, S)
    assert bool(jnp.all(jnp.isfinite(logits)))
    print("KERNEL_OK")
</pallas_src>

<mosaic_0001>
module attributes {stable_mosaic.version = 11 : i64} {
  func.func @_ln_kernel(%arg0: i32, %arg1: memref<16x32xf32, #tpu.memory_space<vmem>>, %arg2: memref<1x32xf32, #tpu.memory_space<vmem>>, %arg3: memref<1x32xf32, #tpu.memory_space<vmem>>, %arg4: memref<16x32xbf16, #tpu.memory_space<vmem>>) attributes {dimension_semantics = [#tpu.dimension_semantics<parallel>], iteration_bounds = array<i64: 1>, scalar_prefetch = 0 : i64, scratch_operands = 0 : i64, tpu.core_type = #tpu.core_type<tc>, window_params = [{transform_indices = @transform_0, window_bounds = array<i64: 16, 32>}, {pipeline_mode = #tpu.pipeline_mode<synchronous>, transform_indices = @transform_1, window_bounds = array<i64: 1, 32>}, {pipeline_mode = #tpu.pipeline_mode<synchronous>, transform_indices = @transform_2, window_bounds = array<i64: 1, 32>}, {transform_indices = @transform_3, window_bounds = array<i64: 16, 32>}]} {
    %c0 = arith.constant 0 : index
    %c0_0 = arith.constant 0 : index
    %0 = vector.load %arg1[%c0, %c0_0] : memref<16x32xf32, #tpu.memory_space<vmem>>, vector<16x32xf32>
    %cst = arith.constant dense<0.000000e+00> : vector<16xf32>
    %1 = vector.multi_reduction <add>, %0, %cst [1] : vector<16x32xf32> to vector<16xf32>
    %2 = vector.shape_cast %1 : vector<16xf32> to vector<16x1xf32>
    %cst_1 = arith.constant 3.200000e+01 : f32
    %3 = vector.broadcast %cst_1 : f32 to vector<16x1xf32>
    %4 = arith.divf %2, %3 : vector<16x1xf32>
    %5 = vector.broadcast %4 : vector<16x1xf32> to vector<16x32xf32>
    %6 = arith.subf %0, %5 : vector<16x32xf32>
    %7 = arith.mulf %6, %6 : vector<16x32xf32>
    %cst_2 = arith.constant dense<0.000000e+00> : vector<16xf32>
    %8 = vector.multi_reduction <add>, %7, %cst_2 [1] : vector<16x32xf32> to vector<16xf32>
    %9 = vector.shape_cast %8 : vector<16xf32> to vector<16x1xf32>
    %cst_3 = arith.constant 3.200000e+01 : f32
    %10 = vector.broadcast %cst_3 : f32 to vector<16x1xf32>
    %11 = arith.divf %9, %10 : vector<16x1xf32>
    %12 = vector.broadcast %4 : vector<16x1xf32> to vector<16x32xf32>
    %13 = arith.subf %0, %12 : vector<16x32xf32>
    %cst_4 = arith.constant 9.99999974E-6 : f32
    %14 = vector.broadcast %cst_4 : f32 to vector<16x1xf32>
    %15 = arith.addf %11, %14 : vector<16x1xf32>
    %16 = math.rsqrt %15 : vector<16x1xf32>
    %17 = vector.broadcast %16 : vector<16x1xf32> to vector<16x32xf32>
    %18 = arith.mulf %13, %17 : vector<16x32xf32>
    %c0_5 = arith.constant 0 : index
    %c0_6 = arith.constant 0 : index
    %19 = vector.load %arg2[%c0_5, %c0_6] : memref<1x32xf32, #tpu.memory_space<vmem>>, vector<1x32xf32>
    %20 = vector.broadcast %19 : vector<1x32xf32> to vector<16x32xf32>
    %21 = arith.mulf %18, %20 : vector<16x32xf32>
    %c0_7 = arith.constant 0 : index
    %c0_8 = arith.constant 0 : index
    %22 = vector.load %arg3[%c0_7, %c0_8] : memref<1x32xf32, #tpu.memory_space<vmem>>, vector<1x32xf32>
    %23 = vector.broadcast %22 : vector<1x32xf32> to vector<16x32xf32>
    %24 = arith.addf %21, %23 : vector<16x32xf32>
    %25 = arith.truncf %24 : vector<16x32xf32> to vector<16x32xbf16>
    %c0_9 = arith.constant 0 : index
    %c0_10 = arith.constant 0 : index
    %26 = vector.load %arg4[%c0_9, %c0_10] : memref<16x32xbf16, #tpu.memory_space<vmem>>, vector<16x32xbf16>
    tpu.vector_store %arg4[%c0_9, %c0_10], %25 {strides = array<i32>} : memref<16x32xbf16, #tpu.memory_space<vmem>>, vector<16x32xbf16>,
    return
  }
  func.func @transform_0(%arg0: i32) -> (i32, i32) {
    %c0_i32 = arith.constant 0 : i32
    %c0_i32_0 = arith.constant 0 : i32
    return %arg0, %c0_i32 : i32, i32
  }
  func.func @transform_1(%arg0: i32) -> (i32, i32) {
    %c0_i32 = arith.constant 0 : i32
    %c0_i32_0 = arith.constant 0 : i32
    %c0_i32_1 = arith.constant 0 : i32
    return %c0_i32, %c0_i32_0 : i32, i32
  }
  func.func @transform_2(%arg0: i32) -> (i32, i32) {
    %c0_i32 = arith.constant 0 : i32
    %c0_i32_0 = arith.constant 0 : i32
    %c0_i32_1 = arith.constant 0 : i32
    return %c0_i32, %c0_i32_0 : i32, i32
  }
  func.func @transform_3(%arg0: i32) -> (i32, i32) {
    %c0_i32 = arith.constant 0 : i32
    %c0_i32_0 = arith.constant 0 : i32
    return %arg0, %c0_i32 : i32, i32
  }
}

</mosaic_0001>

<llo_original>
// kernel: tpu_custom_call.1
$region0: #{tpu_custom_call.1}
  #allocation0 [shape = 'u32[]', space=smem, size = 0x4, offset = 0x4, fixed_abs, tag = 'smem constant byte address 0x4 - core index']
  #allocation1 [shape = 'u32[144,128]{1,0:T(1,128)}', space=vmem, size = 0x12000, scoped, tag = 'internal scratch']
  %s0 = inlined_call_operand.hbm [shape: f32[16,32], index: 0, kind: input, shape index: {}]
  %s1 = inlined_call_operand.vmem [shape: f32[1,32], index: 1, kind: input, shape index: {}]
  %s2 = inlined_call_operand.vmem [shape: f32[1,32], index: 2, kind: input, shape index: {}]
  %s3 = inlined_call_operand.hbm [shape: bf16[16,32], index: 3, kind: output, shape index: {}]
  %s4 = sld [smem:[#allocation0]]
  $region26: #{tpu_custom_call.1} parent=0
    _
  %s6 = ssub.s32 1, %s4
  %s7 = scalar_select 0, %s6, %s4
  $region1: #{tpu_custom_call.1} parent=0
    #allocation2 [shape = 'u8[8192]{0}', space=vmem, size = 0x2000, scoped, tag = 'input window, operand 0, single buffered']
    #allocation3 [shape = 's32[1]{0}', space=sflag, size = 0x4, scoped, tag = 'scoped memory for tpu_custom_call.1']
    #allocation4 [shape = 's32[1]{0}', space=sflag, size = 0x4, scoped, tag = 'scoped memory for tpu_custom_call.1']
    #allocation5 [shape = 'u8[4096]{0}', space=vmem, size = 0x1000, scoped, tag = 'output window, operand 0, single buffered']
    %8 = vsyncpa [#allocation3], 0
    %9 = vsyncpa [#allocation4], 0
    // Predicated region
    $region2: #{tpu_custom_call.1} parent=1 // pred_check
      _
    $region3: #{tpu_custom_call.1} parent=1 // pred_check_branch
      %11 = sbr.rel (0) target = $region5
    $region4: #{tpu_custom_call.1} parent=1 // pred_region
      %s13 = ssub.s32 256, 256
      %14 = vsyncadd [#allocation3], %s13
      %s15 = sshll.u32 [#allocation2], 4
      %s16 = int_to_ptr.vmem [resolvable:$true] %s15
      %21 = dma.hbm_to_vmem [thread:$0]  %s0, 256, %s16, [#allocation3], 128, 128, 8
    $region5: #{tpu_custom_call.1} parent=1 // pred_fallthru
      _
    // Predicated region
    $region6: #{tpu_custom_call.1} parent=1 // pred_check
      _
    $region7: #{tpu_custom_call.1} parent=1 // pred_check_branch
      %23 = sbr.rel (0) target = $region9
    $region8: #{tpu_custom_call.1} parent=1 // pred_region
      _
    $region9: #{tpu_custom_call.1} parent=1 // pred_fallthru
      _
    // Predicated region
    $region10: #{tpu_custom_call.1} parent=1 // pred_check
      _
    $region11: #{tpu_custom_call.1} parent=1 // pred_check_branch
      %25 = sbr.rel (0) target = $region13
    $region12: #{tpu_custom_call.1} parent=1 // pred_region
      _
    $region13: #{tpu_custom_call.1} parent=1 // pred_fallthru
      _
    // Predicated region
    $region14: #{tpu_custom_call.1} parent=1 // pred_check
      _
    $region15: #{tpu_custom_call.1} parent=1 // pred_check_branch
      %27 = sbr.rel (0) target = $region17
    $region16: #{tpu_custom_call.1} parent=1 // pred_region
      %28 = dma.done [#allocation3], 256
    $region17: #{tpu_custom_call.1} parent=1 // pred_fallthru
      _
    %v29 = vld [vmem:[#allocation2] sm:$0xff]
    %v30 = vld [vmem:[#allocation2 + $0x8] sm:$0xff]
    %vm31 = vcmask 261120
    %v32 = vsel %vm31, %v29, 0.0
    %33 = vadd.xlane.f32.xlu0 %v32
    %v34 = vpop.xlane.xlu0 %33
    %v35 = vsel %vm31, %v30, 0.0
    %36 = vadd.xlane.f32.xlu0 %v35
    %v37 = vpop.xlane.xlu0 %36
    %v38 = vrcp.pop 32.0
    %v39 = vmul.f32 %v34, %v38
    %v40 = vmul.f32 %v37, %v38
    %v41 = vsub.f32 %v29, %v39
    %v42 = vsub.f32 %v30, %v40
    %v43 = vmul.f32 %v41, %v41
    %v44 = vmul.f32 %v42, %v42
    %v45 = vsel %vm31, %v43, 0.0
    %46 = vadd.xlane.f32.xlu0 %v45
    %v47 = vpop.xlane.xlu0 %46
    %v48 = vsel %vm31, %v44, 0.0
    %49 = vadd.xlane.f32.xlu0 %v48
    %v50 = vpop.xlane.xlu0 %49
    %v51 = vmul.f32 %v47, %v38
    %v52 = vmul.f32 %v50, %v38
    %v53 = vadd.f32 %v51, 1e-05
    %v54 = vadd.f32 %v52, 1e-05
    %v55 = vrsqrt.pop %v53
    %v56 = vrsqrt.pop %v54
    %v57 = vmul.f32 %v41, %v55
    %v58 = vmul.f32 %v42, %v56
    %v59 = vld [vmem:[%s1] sm:$0x1]
    %v61 = vlaneseq
    %v62 = vshrl.u32 %v61, 7
    %v63 = vsub.s32 0, %v62
    %v64 = vrot.slane %v59, %v63
    %v66 = vmul.f32 %v57, %v64
    %v67 = vmul.f32 %v58, %v64
    %v68 = vld [vmem:[%s2] sm:$0x1]
    %v70 = vlaneseq
    %v71 = vshrl.u32 %v70, 7
    %v72 = vsub.s32 0, %v71
    %v73 = vrot.slane %v68, %v72
    %v75 = vadd.f32 %v66, %v73
    %v76 = vadd.f32 %v67, %v73
    %v77 = vpack.c.bf16 %v76, %v75
    %v79 = vunpack.c.l.b16 %v77
    %v80 = vunpack.c.h.b16 %v77
    %v81 = vpack.c.b16 %v79, %v79
    %v82 = vpack.c.b16 %v80, %v80
    %vm85 = vcmask 257024
    %86 = vst.msk [vmem:[#allocation5] sm:$0xf] %vm85, %v81
    %87 = vst.msk [vmem:[#allocation5 + $0x4] sm:$0xf] %vm85, %v82
    // Predicated region
    $region18: #{tpu_custom_call.1} parent=1 // pred_check
      _
    $region19: #{tpu_custom_call.1} parent=1 // pred_check_branch
      %89 = sbr.rel (0) target = $region21
    $region20: #{tpu_custom_call.1} parent=1 // pred_region
      %s91 = ssub.s32 128, 128
      %92 = vsyncadd [#allocation4], %s91
      %s93 = sshll.u32 [#allocation5], 4
      %s94 = int_to_ptr.vmem [resolvable:$true] %s93
      %99 = dma.vmem_to_hbm [thread:$0]  %s94, 128, %s3, [#allocation4], 64, 64, 4
    $region21: #{tpu_custom_call.1} parent=1 // pred_fallthru
      _
    // Predicated region
    $region22: #{tpu_custom_call.1} parent=1 // pred_check
      _
    $region23: #{tpu_custom_call.1} parent=1 // pred_check_branch
      %101 = sbr.rel (0) target = $region25
    $region24: #{tpu_custom_call.1} parent=1 // pred_region
      %102 = dma.done [#allocation4], 128
    $region25: #{tpu_custom_call.1} parent=1 // pred_fallthru
      _
    %103 = vsyncpa [#allocation3], 1
    %104 = vsyncpa [#allocation4], 1

</llo_original>
